<compile_context>
chip_gen: v5e
topology: v5e:2x2
jax: 0.10.0
libtpu: 0.0.40
codegen_flags: <defaults>
</compile_context>

<pallas_src>
import functools

import jax
import jax.numpy as jnp
from jax import lax
from jax.experimental import pallas as pl
from jax.experimental.pallas import tpu as pltpu

LANE = 128                       # lane-padded feature width used internally
SMALL_VMEM = 32 * 1024 * 1024    # scoped-VMEM limit for the small gridless kernels
MIXHOP_VMEM = 48 * 1024 * 1024   # scoped-VMEM limit for the tiled propagation kernels
_VMEM = pl.BlockSpec(memory_space=pltpu.MemorySpace.VMEM)


# ----------------------------------------------------------------------------- kernels

def _norm_adj_kernel(adj_ref, ncol_ref, nrow_ref, o_ref):
    """One-time setup: adj_norm = norm * adj * norm^T, cast to bf16 for the MXU."""
    # TODO(synk): on v7x store adj_norm as fp8 (e4m3) to halve HBM/VMEM traffic (v7x MXU
    # accepts fp8; v6e/v5e do not) -- validate numerics against the f32 reference first.
    o_ref[...] = (adj_ref[...] * ncol_ref[...] * nrow_ref[...]).astype(o_ref.dtype)


def _fc_kernel(x_ref, w_ref, b_ref, o_ref):
    """Per-node-type input projection (d_fc or m_fc); dropout = identity (eval mode)."""
    o_ref[...] = (jnp.dot(x_ref[...], w_ref[...], preferred_element_type=jnp.float32)
                  + b_ref[...]).astype(o_ref.dtype)


def _project_kernel(h_ref, w_ref, o_ref):
    """Power-0 projection: out_slab = feats @ W_0 (row-tiled, lane-dense slab)."""
    o_ref[...] = jnp.dot(h_ref[...], w_ref[...],
                         preferred_element_type=jnp.float32).astype(o_ref.dtype)


def _prop_kernel(adj_ref, h_ref, *rest, project):
    """One hop of MixHopConv propagation, tiled: h_next = adj_norm @ h.

    Grid = (rows "parallel", reduction "arbitrary"); f32 accumulator in VMEM scratch.
    If `project`, the finalize also emits the power-j output slab = h_next @ W_j,
    reusing a single bf16 cast of the accumulator.
    """
    if project:
        w_ref, hnext_ref, slab_ref, acc_ref = rest
    else:
        hnext_ref, acc_ref = rest

    k = pl.program_id(1)

    @pl.when(k == 0)
    def _init():
        acc_ref[...] = jnp.zeros_like(acc_ref)

    acc_ref[...] += jnp.dot(adj_ref[...], h_ref[...],
                            preferred_element_type=jnp.float32)

    @pl.when(k == pl.num_programs(1) - 1)
    def _finalize():
        hb = acc_ref[...].astype(jnp.bfloat16)   # single cast, reused below
        hnext_ref[...] = hb                       # h carried between hops as bf16
        if project:
            slab_ref[...] = jnp.dot(hb, w_ref[...],
                                    preferred_element_type=jnp.float32
                                    ).astype(slab_ref.dtype)


def _head_kernel(feats_ref, sim_ref, wfc_ref, wa_ref, wb_ref, b_ref, o_ref):
    """fc_layers (bias=False) + concat-with-sim (via split weights) + ELU(d/m_fc1).

    Runs on one node-type's rows only (disease OR miRNA), so there is no redundant
    branch work and no row select.
    """
    z = jnp.dot(feats_ref[...], wfc_ref[...], preferred_element_type=jnp.float32)
    y = (jnp.dot(z.astype(jnp.bfloat16), wa_ref[...], preferred_element_type=jnp.float32)
         + jnp.dot(sim_ref[...], wb_ref[...], preferred_element_type=jnp.float32)
         + b_ref[...])
    # ELU without inf intermediates on the positive branch (dropout = identity).
    y = jnp.where(y > 0.0, y, jnp.expm1(jnp.minimum(y, 0.0)))
    o_ref[...] = y.astype(o_ref.dtype)


def _predict_kernel(hs_ref, hd_ref, w1a_ref, w1b_ref, b1_ref, w2_ref, b2_ref, o_ref):
    """Sequential(Linear, ReLU, Linear, Sigmoid); pred_w1 split so concat is never built.

    Gridded over edge tiles; only the single valid score lane is activated / stored.
    """
    y = (jnp.dot(hs_ref[...], w1a_ref[...], preferred_element_type=jnp.float32)
         + jnp.dot(hd_ref[...], w1b_ref[...], preferred_element_type=jnp.float32)
         + b1_ref[...])
    y = jnp.maximum(y, 0.0)
    y = (jnp.dot(y.astype(jnp.bfloat16), w2_ref[...], preferred_element_type=jnp.float32)
         + b2_ref[...])
    ys = y[:, :1]                                  # only lane 0 holds the real score
    ey = jnp.exp(-jnp.abs(ys))                     # stable sigmoid (exp of non-positive)
    o_ref[...] = jnp.where(ys >= 0.0, 1.0, ey) / (1.0 + ey)


# ---------------------------------------------------------------------- pallas wrappers

def _pick_tile(n, preferred, align):
    """Largest multiple of `align` that divides n, capped at `preferred`; falls back to n."""
    # TODO(synk): for N not divisible by any aligned tile, pad adj/feats to a tile multiple
    # instead of falling back to a full-extent (gridless) block.
    t = min(preferred, (n // align) * align)
    while t >= align:
        if n % t == 0:
            return t
        t -= align
    return n


def normalize_adj(adj):
    """D^-1/2 A D^-1/2 with in-degrees clamped at 1; result stored once as bf16."""
    deg = jnp.maximum(adj.sum(axis=1), 1.0)
    norm = (deg ** -0.5).astype(jnp.float32)
    # TODO(synk): tile this one-time setup kernel as well for graphs where adj (N,N) f32
    # does not fit a single VMEM window.
    return pl.pallas_call(
        _norm_adj_kernel,
        out_shape=jax.ShapeDtypeStruct(adj.shape, jnp.bfloat16),
        in_specs=[_VMEM, _VMEM, _VMEM],
        out_specs=_VMEM,
        compiler_params=pltpu.CompilerParams(vmem_limit_bytes=SMALL_VMEM),
    )(adj.astype(jnp.float32), norm.reshape(-1, 1), norm.reshape(1, -1))


def _fc(x, w, b):
    rows = x.shape[0]
    return pl.pallas_call(
        _fc_kernel,
        out_shape=jax.ShapeDtypeStruct((rows, LANE), jnp.bfloat16),
        in_specs=[_VMEM, _VMEM, _VMEM],
        out_specs=_VMEM,
        compiler_params=pltpu.CompilerParams(vmem_limit_bytes=SMALL_VMEM),
    )(x, w, b)


def _project(h, w, tm):
    n, win = h.shape
    tm = _pick_tile(n, tm, 8)
    return pl.pallas_call(
        _project_kernel,
        grid=(n // tm,),
        in_specs=[pl.BlockSpec((tm, win), lambda i: (i, 0)),
                  pl.BlockSpec((win, LANE), lambda i: (0, 0))],
        out_specs=pl.BlockSpec((tm, LANE), lambda i: (i, 0)),
        out_shape=jax.ShapeDtypeStruct((n, LANE), jnp.bfloat16),
        compiler_params=pltpu.CompilerParams(
            dimension_semantics=("parallel",),
            vmem_limit_bytes=MIXHOP_VMEM),
    )(h, w)


def _propagate(adj_norm, h, w, tm, tk, project):
    """Tiled h_next = adj_norm @ h (accumulator pattern); optional fused projection slab."""
    n = adj_norm.shape[0]
    win = h.shape[1]

    in_specs = [
        # TODO(synk): if profiling shows the adj stream exposed on v7x, switch this spec to
        # pipeline_mode=pl.Buffered(3); also TODO: block-sparse skip of all-zero (tm, tk)
        # adj tiles via scalar-prefetched per-row block lists (P2) for sparse graphs.
        pl.BlockSpec((tm, tk), lambda i, k: (i, k)),
        pl.BlockSpec((tk, win), lambda i, k: (k, 0)),
    ]
    args = [adj_norm, h]
    out_shape = [jax.ShapeDtypeStruct((n, win), jnp.bfloat16)]
    out_specs = [pl.BlockSpec((tm, win), lambda i, k: (i, 0))]
    if project:
        in_specs.append(pl.BlockSpec((win, LANE), lambda i, k: (0, 0)))
        args.append(w)
        out_shape.append(jax.ShapeDtypeStruct((n, LANE), jnp.bfloat16))
        out_specs.append(pl.BlockSpec((tm, LANE), lambda i, k: (i, 0)))

    out = pl.pallas_call(
        functools.partial(_prop_kernel, project=project),
        grid=(n // tm, n // tk),
        in_specs=in_specs,
        out_specs=out_specs,
        out_shape=out_shape,
        scratch_shapes=[pltpu.VMEM((tm, win), jnp.float32)],
        compiler_params=pltpu.CompilerParams(
            dimension_semantics=("parallel", "arbitrary"),
            vmem_limit_bytes=MIXHOP_VMEM),
    )(*args)
    if project:
        return out[0], out[1]
    return out[0], None


def _mixhop_layer(adj_norm, feats, layer_ws, powers, tm, tk):
    """One MixHopConv layer: hops are tiled matmuls; projections fused into hop finalize."""
    # TODO(synk): on v6e with moderate N (adj_norm <= ~VMEM) a variant that keeps adj_norm
    # VMEM-resident across all hops of the layer streams adj from HBM once per layer
    # instead of once per hop (propagation is HBM-bound there).
    w_of = {j: layer_ws[idx] for idx, j in enumerate(powers)}
    max_j = max(powers)
    slabs = {}
    h = feats
    if 0 in powers:
        slabs[0] = _project(h, w_of[0], tm)
    for j in range(1, max_j + 1):
        project = j in powers
        h, slab = _propagate(adj_norm, h, w_of.get(j), tm, tk, project)
        if project:
            slabs[j] = slab
    return jnp.concatenate([slabs[j] for j in powers], axis=1)


def _head(feats_rows, sim_rows, wfc, wa, wb, b):
    rows = feats_rows.shape[0]
    return pl.pallas_call(
        _head_kernel,
        out_shape=jax.ShapeDtypeStruct((rows, LANE), jnp.bfloat16),
        in_specs=[_VMEM] * 6,
        out_specs=_VMEM,
        compiler_params=pltpu.CompilerParams(vmem_limit_bytes=SMALL_VMEM),
    )(feats_rows, sim_rows, wfc, wa, wb, b)


def _predict(hs, hd, prep, te=128):
    e = hs.shape[0]
    te = _pick_tile(e, te, 8)
    row = lambda i: (i, 0)
    full = lambda i: (0, 0)
    return pl.pallas_call(
        _predict_kernel,
        grid=(e // te,),
        in_specs=[pl.BlockSpec((te, LANE), row), pl.BlockSpec((te, LANE), row),
                  pl.BlockSpec((LANE, LANE), full), pl.BlockSpec((LANE, LANE), full),
                  pl.BlockSpec((1, LANE), full),
                  pl.BlockSpec((LANE, LANE), full), pl.BlockSpec((1, LANE), full)],
        out_specs=pl.BlockSpec((te, 1), row),
        out_shape=jax.ShapeDtypeStruct((e, 1), jnp.float32),
        compiler_params=pltpu.CompilerParams(
            dimension_semantics=("parallel",),
            vmem_limit_bytes=SMALL_VMEM),
    )(hs, hd, prep["pred_w1a"], prep["pred_w1b"], prep["pred_b1"],
      prep["pred_w2"], prep["pred_b2"])


def mixhop_forward(prep, adj_norm, src, dst, *, disease_number, powers, tm=256, tk=512):
    n = adj_norm.shape[0]
    tm = _pick_tile(n, tm, 8)
    tk = _pick_tile(n, tk, 128)

    # Input projections, split by node type (no redundant branch + select).
    fd = _fc(prep["d_sim"], prep["d_fc_w"], prep["d_fc_b"])
    fm = _fc(prep["m_sim"], prep["m_fc_w"], prep["m_fc_b"])
    feats = jnp.concatenate([fd, fm], axis=0)

    for layer_ws in prep["mixhop_layers"]:
        feats = _mixhop_layer(adj_norm, feats, layer_ws, powers, tm, tk)

    # fc_layers + concat-with-sim + ELU(d/m_fc1), split by node type.
    hd = _head(feats[:disease_number], prep["d_sim"], prep["fc_w"],
               prep["d_fc1_wa"], prep["d_fc1_wb"], prep["d_fc1_b"])
    hm = _head(feats[disease_number:], prep["m_sim"], prep["fc_w"],
               prep["m_fc1_wa"], prep["m_fc1_wb"], prep["m_fc1_b"])
    h = jnp.concatenate([hd, hm], axis=0)

    # TODO(synk): for large edge counts fuse this gather into the predict kernel via
    # PrefetchScalarGridSpec + pl.Element row index_map so h[src]/h[dst] never round-trip HBM.
    h_src = jnp.take(h, src, axis=0)
    h_dst = jnp.take(h, dst, axis=0)

    return _predict(h_src, h_dst, prep)


# ------------------------------------------------------------------------------- params

def init_raw_params(key, *, d_sim_dim, m_sim_dim, hid_dim, out_dim, num_layers, p):
    """PyTorch-layout parameters (weights stored as (in, out) = torch weight.T), f32."""
    keys = iter(jax.random.split(key, 64))

    def w(shape, scale=0.1):
        return (scale * jax.random.normal(next(keys), shape)).astype(jnp.float32)

    raw = {
        "d_fc_w": w((d_sim_dim, hid_dim)), "d_fc_b": w((hid_dim,)),
        "m_fc_w": w((m_sim_dim, hid_dim)), "m_fc_b": w((hid_dim,)),
        "fc_layers_w": w((hid_dim * len(p), out_dim)),
        "m_fc1_w": w((out_dim + m_sim_dim, out_dim)), "m_fc1_b": w((out_dim,)),
        "d_fc1_w": w((out_dim + d_sim_dim, out_dim)), "d_fc1_b": w((out_dim,)),
        "pred_w1": w((out_dim * 2, out_dim)), "pred_b1": w((out_dim,)),
        "pred_w2": w((out_dim, 1)), "pred_b2": w((1,)),
        "mixhop_layers": [{j: w((hid_dim, out_dim)) for j in p}],
    }
    for _ in range(num_layers - 2):
        raw["mixhop_layers"].append({j: w((hid_dim * len(p), hid_dim)) for j in p})
    return raw


def prepare_params(raw, d_sim, m_sim, *, p, out_dim):
    """One-time pad-to-128-lanes + bf16 cast of every MXU operand (biases stay f32).

    d_sim has shape (disease_number, d_sim_dim); m_sim has shape (mirna_number, m_sim_dim).
    """
    powers = tuple(sorted(p))

    def pad2(x, rows, cols):
        buf = jnp.zeros((rows, cols), jnp.float32)
        return buf.at[:x.shape[0], :x.shape[1]].set(x.astype(jnp.float32))

    def bfw(x):
        return x.astype(jnp.bfloat16)

    def pad_bias(b):
        return pad2(b.reshape(1, -1), 1, LANE)

    def pad_block_w(w, n_blocks):
        # input is a concat of n_blocks blocks of width block_in; each block moves to a
        # 128-lane slab so it matches the lane-padded activation layout.
        block_in = w.shape[0] // n_blocks
        buf = jnp.zeros((n_blocks * LANE, LANE), jnp.float32)
        for i in range(n_blocks):
            buf = buf.at[i * LANE:i * LANE + block_in, :w.shape[1]].set(
                w[i * block_in:(i + 1) * block_in])
        return buf

    prep = {
        "d_sim": d_sim.astype(jnp.bfloat16),
        "m_sim": m_sim.astype(jnp.bfloat16),
        "d_fc_w": bfw(pad2(raw["d_fc_w"], raw["d_fc_w"].shape[0], LANE)),
        "d_fc_b": pad_bias(raw["d_fc_b"]),
        "m_fc_w": bfw(pad2(raw["m_fc_w"], raw["m_fc_w"].shape[0], LANE)),
        "m_fc_b": pad_bias(raw["m_fc_b"]),
        "fc_w": bfw(pad_block_w(raw["fc_layers_w"], len(powers))),
        "d_fc1_wa": bfw(pad2(raw["d_fc1_w"][:out_dim], LANE, LANE)),
        "d_fc1_wb": bfw(pad2(raw["d_fc1_w"][out_dim:],
                             raw["d_fc1_w"].shape[0] - out_dim, LANE)),
        "d_fc1_b": pad_bias(raw["d_fc1_b"]),
        "m_fc1_wa": bfw(pad2(raw["m_fc1_w"][:out_dim], LANE, LANE)),
        "m_fc1_wb": bfw(pad2(raw["m_fc1_w"][out_dim:],
                             raw["m_fc1_w"].shape[0] - out_dim, LANE)),
        "m_fc1_b": pad_bias(raw["m_fc1_b"]),
        "pred_w1a": bfw(pad2(raw["pred_w1"][:out_dim], LANE, LANE)),
        "pred_w1b": bfw(pad2(raw["pred_w1"][out_dim:], LANE, LANE)),
        "pred_b1": pad_bias(raw["pred_b1"]),
        "pred_w2": bfw(pad2(raw["pred_w2"], LANE, LANE)),
        "pred_b2": pad_bias(raw["pred_b2"]),
        "mixhop_layers": [],
    }
    for li, layer_w in enumerate(raw["mixhop_layers"]):
        n_blocks = 1 if li == 0 else len(powers)
        prep["mixhop_layers"].append(
            [bfw(pad_block_w(layer_w[j], n_blocks)) for j in powers])
    return prep


# --------------------------------------------------------------------------------- main

if __name__ == "__main__":
    # Small synthetic configuration, sized so the tiled propagation grid is actually
    # exercised (2x2 grid with tm=tk=128).  hid_dim == out_dim so stacked MixHopConv
    # layers compose, as required by the original module's constructor.
    disease_number = 128
    mirna_number = 128
    N = disease_number + mirna_number
    d_sim_dim = 64
    m_sim_dim = 96
    hid_dim = 64
    out_dim = 64
    num_layers = 3
    p = [0, 1, 2]
    num_edges = 256

    key = jax.random.PRNGKey(0)
    k_par, k_d, k_m, k_adj, k_src, k_dst = jax.random.split(key, 6)

    raw = init_raw_params(k_par, d_sim_dim=d_sim_dim, m_sim_dim=m_sim_dim,
                          hid_dim=hid_dim, out_dim=out_dim,
                          num_layers=num_layers, p=p)

    d_sim = jax.random.normal(k_d, (disease_number, d_sim_dim), dtype=jnp.float32)
    m_sim = jax.random.normal(k_m, (mirna_number, m_sim_dim), dtype=jnp.float32)

    # random symmetric adjacency (dense), no self loops required
    a = (jax.random.uniform(k_adj, (N, N)) < 0.1).astype(jnp.float32)
    adj = jnp.maximum(a, a.T)

    src = jax.random.randint(k_src, (num_edges,), 0, disease_number)
    dst = jax.random.randint(k_dst, (num_edges,), disease_number, N)

    # One-time setup: pad/cast params and pre-normalize the adjacency.
    prep = prepare_params(raw, d_sim, m_sim, p=p, out_dim=out_dim)
    adj_norm = normalize_adj(adj)

    # TODO(synk): dropout layers run in eval mode (identity); stochastic training-mode
    # dropout is not implemented.
    fwd = jax.jit(functools.partial(mixhop_forward,
                                    disease_number=disease_number,
                                    powers=tuple(sorted(p)),
                                    tm=128, tk=128))
    score = jax.block_until_ready(fwd(prep, adj_norm, src, dst))
    assert score.shape == (num_edges, 1)
    assert bool(jnp.all((score >= 0.0) & (score <= 1.0)))
    print("KERNEL_OK")
</pallas_src>

<mosaic_0001>
module attributes {stable_mosaic.version = 11 : i64} {
  func.func @_norm_adj_kernel(%arg0: memref<256x256xf32, #tpu.memory_space<vmem>>, %arg1: memref<256x1xf32, #tpu.memory_space<vmem>>, %arg2: memref<1x256xf32, #tpu.memory_space<vmem>>, %arg3: memref<256x256xbf16, #tpu.memory_space<vmem>>) attributes {dimension_semantics = [], scalar_prefetch = 0 : i64, scratch_operands = 0 : i64, tpu.core_type = #tpu.core_type<tc>} {
    %c0 = arith.constant 0 : index
    %c0_0 = arith.constant 0 : index
    %0 = vector.load %arg0[%c0, %c0_0] : memref<256x256xf32, #tpu.memory_space<vmem>>, vector<256x256xf32>
    %c0_1 = arith.constant 0 : index
    %c0_2 = arith.constant 0 : index
    %1 = vector.load %arg1[%c0_1, %c0_2] : memref<256x1xf32, #tpu.memory_space<vmem>>, vector<256x1xf32>
    %2 = vector.broadcast %1 : vector<256x1xf32> to vector<256x256xf32>
    %3 = arith.mulf %0, %2 : vector<256x256xf32>
    %c0_3 = arith.constant 0 : index
    %c0_4 = arith.constant 0 : index
    %4 = vector.load %arg2[%c0_3, %c0_4] : memref<1x256xf32, #tpu.memory_space<vmem>>, vector<1x256xf32>
    %5 = vector.broadcast %4 : vector<1x256xf32> to vector<256x256xf32>
    %6 = arith.mulf %3, %5 : vector<256x256xf32>
    %7 = arith.truncf %6 : vector<256x256xf32> to vector<256x256xbf16>
    %c0_5 = arith.constant 0 : index
    %c0_6 = arith.constant 0 : index
    %8 = vector.load %arg3[%c0_5, %c0_6] : memref<256x256xbf16, #tpu.memory_space<vmem>>, vector<256x256xbf16>
    tpu.vector_store %arg3[%c0_5, %c0_6], %7 {strides = array<i32>} : memref<256x256xbf16, #tpu.memory_space<vmem>>, vector<256x256xbf16>,
    return
  }
}

</mosaic_0001>

<llo_original>
// kernel: tpu_custom_call.1
$region0: #{tpu_custom_call.1}
  #allocation0 [shape = 'u32[]', space=smem, size = 0x4, offset = 0x4, fixed_abs, tag = 'smem constant byte address 0x4 - core index']
  #allocation1 [shape = 'u32[72,128]{1,0:T(1,128)}', space=vmem, size = 0x9000, scoped, tag = 'internal scratch']
  %s0 = inlined_call_operand.hbm [shape: f32[256,256], index: 0, kind: input, shape index: {}]
  %s1 = inlined_call_operand.vmem [shape: f32[256,1], index: 1, kind: input, shape index: {}]
  %s2 = inlined_call_operand.vmem [shape: f32[1,256], index: 2, kind: input, shape index: {}]
  %s3 = inlined_call_operand.hbm [shape: bf16[256,256], index: 3, kind: output, shape index: {}]
  %s4 = sld [smem:[#allocation0]]
  $region26: #{tpu_custom_call.1} parent=0
    _
  %s6 = ssub.s32 1, %s4
  %s7 = scalar_select 0, %s6, %s4
  $region1: #{tpu_custom_call.1} parent=0
    #allocation2 [shape = 'u8[262144]{0}', space=vmem, size = 0x40000, scoped, tag = 'input window, operand 0, single buffered']
    #allocation3 [shape = 's32[1]{0}', space=sflag, size = 0x4, scoped, tag = 'scoped memory for tpu_custom_call.1']
    #allocation4 [shape = 's32[1]{0}', space=sflag, size = 0x4, scoped, tag = 'scoped memory for tpu_custom_call.1']
    #allocation5 [shape = 'u8[131072]{0}', space=vmem, size = 0x20000, scoped, tag = 'output window, operand 0, single buffered']
    %8 = vsyncpa [#allocation3], 0
    %9 = vsyncpa [#allocation4], 0
    // Predicated region
    $region2: #{tpu_custom_call.1} parent=1 // pred_check
      _
    $region3: #{tpu_custom_call.1} parent=1 // pred_check_branch
      %11 = sbr.rel (0) target = $region5
    $region4: #{tpu_custom_call.1} parent=1 // pred_region
      %13 = vsyncadd [#allocation3], 0
      %s14 = sshll.u32 %s0, 4
      %s15 = int_to_ptr.hbm [resolvable:$true] %s14
      %s16 = sshll.u32 [#allocation2], 4
      %s17 = int_to_ptr.vmem [resolvable:$true] %s16
      %22 = dma.hbm_to_vmem [thread:$0]  %s15, 8192, %s17, [#allocation3], 256, 256, 16
    $region5: #{tpu_custom_call.1} parent=1 // pred_fallthru
      _
    // Predicated region
    $region6: #{tpu_custom_call.1} parent=1 // pred_check
      _
    $region7: #{tpu_custom_call.1} parent=1 // pred_check_branch
      %24 = sbr.rel (0) target = $region9
    $region8: #{tpu_custom_call.1} parent=1 // pred_region
      _
    $region9: #{tpu_custom_call.1} parent=1 // pred_fallthru
      _
    // Predicated region
    $region10: #{tpu_custom_call.1} parent=1 // pred_check
      _
    $region11: #{tpu_custom_call.1} parent=1 // pred_check_branch
      %26 = sbr.rel (0) target = $region13
    $region12: #{tpu_custom_call.1} parent=1 // pred_region
      _
    $region13: #{tpu_custom_call.1} parent=1 // pred_fallthru
      _
    // Predicated region
    $region14: #{tpu_custom_call.1} parent=1 // pred_check
      _
    $region15: #{tpu_custom_call.1} parent=1 // pred_check_branch
      %28 = sbr.rel (0) target = $region17
    $region16: #{tpu_custom_call.1} parent=1 // pred_region
      %30 = dma.done [#allocation3], 8192
    $region17: #{tpu_custom_call.1} parent=1 // pred_fallthru
      _
    %v31 = vld [vmem:[#allocation2] sm:$0xff]
    %v32 = vld [vmem:[#allocation2 + $0x8] sm:$0xff]
    %v33 = vld [vmem:[#allocation2 + $0x10] sm:$0xff]
    %v34 = vld [vmem:[#allocation2 + $0x18] sm:$0xff]
    %v35 = vld [vmem:[#allocation2 + $0x20] sm:$0xff]
    %v36 = vld [vmem:[#allocation2 + $0x28] sm:$0xff]
    %v37 = vld [vmem:[#allocation2 + $0x30] sm:$0xff]
    %v38 = vld [vmem:[#allocation2 + $0x38] sm:$0xff]
    %v39 = vld [vmem:[#allocation2 + $0x40] sm:$0xff]
    %v40 = vld [vmem:[#allocation2 + $0x48] sm:$0xff]
    %v41 = vld [vmem:[#allocation2 + $0x50] sm:$0xff]
    %v42 = vld [vmem:[#allocation2 + $0x58] sm:$0xff]
    %v43 = vld [vmem:[#allocation2 + $0x60] sm:$0xff]
    %v44 = vld [vmem:[#allocation2 + $0x68] sm:$0xff]
    %v45 = vld [vmem:[#allocation2 + $0x70] sm:$0xff]
    %v46 = vld [vmem:[#allocation2 + $0x78] sm:$0xff]
    %v47 = vld [vmem:[#allocation2 + $0x80] sm:$0xff]
    %v48 = vld [vmem:[#allocation2 + $0x88] sm:$0xff]
    %v49 = vld [vmem:[#allocation2 + $0x90] sm:$0xff]
    %v50 = vld [vmem:[#allocation2 + $0x98] sm:$0xff]
    %v51 = vld [vmem:[#allocation2 + $0xa0] sm:$0xff]
    %v52 = vld [vmem:[#allocation2 + $0xa8] sm:$0xff]
    %v53 = vld [vmem:[#allocation2 + $0xb0] sm:$0xff]
    %v54 = vld [vmem:[#allocation2 + $0xb8] sm:$0xff]
    %v55 = vld [vmem:[#allocation2 + $0xc0] sm:$0xff]
    %v56 = vld [vmem:[#allocation2 + $0xc8] sm:$0xff]
    %v57 = vld [vmem:[#allocation2 + $0xd0] sm:$0xff]
    %v58 = vld [vmem:[#allocation2 + $0xd8] sm:$0xff]
    %v59 = vld [vmem:[#allocation2 + $0xe0] sm:$0xff]
    %v60 = vld [vmem:[#allocation2 + $0xe8] sm:$0xff]
    %v61 = vld [vmem:[#allocation2 + $0xf0] sm:$0xff]
    %v62 = vld [vmem:[#allocation2 + $0xf8] sm:$0xff]
    %v63 = vld [vmem:[#allocation2 + $0x100] sm:$0xff]
    %v64 = vld [vmem:[#allocation2 + $0x108] sm:$0xff]
    %v65 = vld [vmem:[#allocation2 + $0x110] sm:$0xff]
    %v66 = vld [vmem:[#allocation2 + $0x118] sm:$0xff]
    %v67 = vld [vmem:[#allocation2 + $0x120] sm:$0xff]
    %v68 = vld [vmem:[#allocation2 + $0x128] sm:$0xff]
    %v69 = vld [vmem:[#allocation2 + $0x130] sm:$0xff]
    %v70 = vld [vmem:[#allocation2 + $0x138] sm:$0xff]
    %v71 = vld [vmem:[#allocation2 + $0x140] sm:$0xff]
    %v72 = vld [vmem:[#allocation2 + $0x148] sm:$0xff]
    %v73 = vld [vmem:[#allocation2 + $0x150] sm:$0xff]
    %v74 = vld [vmem:[#allocation2 + $0x158] sm:$0xff]
    %v75 = vld [vmem:[#allocation2 + $0x160] sm:$0xff]
    %v76 = vld [vmem:[#allocation2 + $0x168] sm:$0xff]
    %v77 = vld [vmem:[#allocation2 + $0x170] sm:$0xff]
    %v78 = vld [vmem:[#allocation2 + $0x178] sm:$0xff]
    %v79 = vld [vmem:[#allocation2 + $0x180] sm:$0xff]
    %v80 = vld [vmem:[#allocation2 + $0x188] sm:$0xff]
    %v81 = vld [vmem:[#allocation2 + $0x190] sm:$0xff]
    %v82 = vld [vmem:[#allocation2 + $0x198] sm:$0xff]
    %v83 = vld [vmem:[#allocation2 + $0x1a0] sm:$0xff]
    %v84 = vld [vmem:[#allocation2 + $0x1a8] sm:$0xff]
    %v85 = vld [vmem:[#allocation2 + $0x1b0] sm:$0xff]
    %v86 = vld [vmem:[#allocation2 + $0x1b8] sm:$0xff]
    %v87 = vld [vmem:[#allocation2 + $0x1c0] sm:$0xff]
    %v88 = vld [vmem:[#allocation2 + $0x1c8] sm:$0xff]
    %v89 = vld [vmem:[#allocation2 + $0x1d0] sm:$0xff]
    %v90 = vld [vmem:[#allocation2 + $0x1d8] sm:$0xff]
    %v91 = vld [vmem:[#allocation2 + $0x1e0] sm:$0xff]
    %v92 = vld [vmem:[#allocation2 + $0x1e8] sm:$0xff]
    %v93 = vld [vmem:[#allocation2 + $0x1f0] sm:$0xff]
    %v94 = vld [vmem:[#allocation2 + $0x1f8] sm:$0xff]
    %v95 = vld [vmem:[%s1] sm:$0xff]
    %v96 = vld [vmem:[%s1 + $0x8] sm:$0xff]
    %v97 = vld [vmem:[%s1 + $0x10] sm:$0xff]
    %v98 = vld [vmem:[%s1 + $0x18] sm:$0xff]
    %v99 = vld [vmem:[%s1 + $0x20] sm:$0xff]
    %v100 = vld [vmem:[%s1 + $0x28] sm:$0xff]
    %v101 = vld [vmem:[%s1 + $0x30] sm:$0xff]
    %v102 = vld [vmem:[%s1 + $0x38] sm:$0xff]
    %v103 = vld [vmem:[%s1 + $0x40] sm:$0xff]
    %v104 = vld [vmem:[%s1 + $0x48] sm:$0xff]
    %v105 = vld [vmem:[%s1 + $0x50] sm:$0xff]
    %v106 = vld [vmem:[%s1 + $0x58] sm:$0xff]
    %v107 = vld [vmem:[%s1 + $0x60] sm:$0xff]
    %v108 = vld [vmem:[%s1 + $0x68] sm:$0xff]
    %v109 = vld [vmem:[%s1 + $0x70] sm:$0xff]
    %v110 = vld [vmem:[%s1 + $0x78] sm:$0xff]
    %v111 = vld [vmem:[%s1 + $0x80] sm:$0xff]
    %v112 = vld [vmem:[%s1 + $0x88] sm:$0xff]
    %v113 = vld [vmem:[%s1 + $0x90] sm:$0xff]
    %v114 = vld [vmem:[%s1 + $0x98] sm:$0xff]
    %v115 = vld [vmem:[%s1 + $0xa0] sm:$0xff]
    %v116 = vld [vmem:[%s1 + $0xa8] sm:$0xff]
    %v117 = vld [vmem:[%s1 + $0xb0] sm:$0xff]
    %v118 = vld [vmem:[%s1 + $0xb8] sm:$0xff]
    %v119 = vld [vmem:[%s1 + $0xc0] sm:$0xff]
    %v120 = vld [vmem:[%s1 + $0xc8] sm:$0xff]
    %v121 = vld [vmem:[%s1 + $0xd0] sm:$0xff]
    %v122 = vld [vmem:[%s1 + $0xd8] sm:$0xff]
    %v123 = vld [vmem:[%s1 + $0xe0] sm:$0xff]
    %v124 = vld [vmem:[%s1 + $0xe8] sm:$0xff]
    %v125 = vld [vmem:[%s1 + $0xf0] sm:$0xff]
    %v126 = vld [vmem:[%s1 + $0xf8] sm:$0xff]
    %128 = vset.pattern.permute.xlu0 0
    %129 = vperm.xlu0 %128, %v95
    %v130 = vpop.permute.xlu0 %129
    %133 = vset.pattern.permute.xlu0 0
    %134 = vperm.xlu0 %133, %v96
    %v135 = vpop.permute.xlu0 %134
    %138 = vset.pattern.permute.xlu0 0
    %139 = vperm.xlu0 %138, %v97
    %v140 = vpop.permute.xlu0 %139
    %143 = vset.pattern.permute.xlu0 0
    %144 = vperm.xlu0 %143, %v98
    %v145 = vpop.permute.xlu0 %144
    %148 = vset.pattern.permute.xlu0 0
    %149 = vperm.xlu0 %148, %v99
    %v150 = vpop.permute.xlu0 %149
    %153 = vset.pattern.permute.xlu0 0
    %154 = vperm.xlu0 %153, %v100
    %v155 = vpop.permute.xlu0 %154
    %158 = vset.pattern.permute.xlu0 0
    %159 = vperm.xlu0 %158, %v101
    %v160 = vpop.permute.xlu0 %159
    %163 = vset.pattern.permute.xlu0 0
    %164 = vperm.xlu0 %163, %v102
    %v165 = vpop.permute.xlu0 %164
    %168 = vset.pattern.permute.xlu0 0
    %169 = vperm.xlu0 %168, %v103
    %v170 = vpop.permute.xlu0 %169
    %173 = vset.pattern.permute.xlu0 0
    %174 = vperm.xlu0 %173, %v104
    %v175 = vpop.permute.xlu0 %174
    %178 = vset.pattern.permute.xlu0 0
    %179 = vperm.xlu0 %178, %v105
    %v180 = vpop.permute.xlu0 %179
    %183 = vset.pattern.permute.xlu0 0
    %184 = vperm.xlu0 %183, %v106
    %v185 = vpop.permute.xlu0 %184
    %188 = vset.pattern.permute.xlu0 0
    %189 = vperm.xlu0 %188, %v107
    %v190 = vpop.permute.xlu0 %189
    %193 = vset.pattern.permute.xlu0 0
    %194 = vperm.xlu0 %193, %v108
    %v195 = vpop.permute.xlu0 %194
    %198 = vset.pattern.permute.xlu0 0
    %199 = vperm.xlu0 %198, %v109
    %v200 = vpop.permute.xlu0 %199
    %203 = vset.pattern.permute.xlu0 0
    %204 = vperm.xlu0 %203, %v110
    %v205 = vpop.permute.xlu0 %204
    %208 = vset.pattern.permute.xlu0 0
    %209 = vperm.xlu0 %208, %v111
    %v210 = vpop.permute.xlu0 %209
    %213 = vset.pattern.permute.xlu0 0
    %214 = vperm.xlu0 %213, %v112
    %v215 = vpop.permute.xlu0 %214
    %218 = vset.pattern.permute.xlu0 0
    %219 = vperm.xlu0 %218, %v113
    %v220 = vpop.permute.xlu0 %219
    %223 = vset.pattern.permute.xlu0 0
    %224 = vperm.xlu0 %223, %v114
    %v225 = vpop.permute.xlu0 %224
    %228 = vset.pattern.permute.xlu0 0
    %229 = vperm.xlu0 %228, %v115
    %v230 = vpop.permute.xlu0 %229
    %233 = vset.pattern.permute.xlu0 0
    %234 = vperm.xlu0 %233, %v116
    %v235 = vpop.permute.xlu0 %234
    %238 = vset.pattern.permute.xlu0 0
    %239 = vperm.xlu0 %238, %v117
    %v240 = vpop.permute.xlu0 %239
    %243 = vset.pattern.permute.xlu0 0
    %244 = vperm.xlu0 %243, %v118
    %v245 = vpop.permute.xlu0 %244
    %248 = vset.pattern.permute.xlu0 0
    %249 = vperm.xlu0 %248, %v119
    %v250 = vpop.permute.xlu0 %249
    %253 = vset.pattern.permute.xlu0 0
    %254 = vperm.xlu0 %253, %v120
    %v255 = vpop.permute.xlu0 %254
    %258 = vset.pattern.permute.xlu0 0
    %259 = vperm.xlu0 %258, %v121
    %v260 = vpop.permute.xlu0 %259
    %263 = vset.pattern.permute.xlu0 0
    %264 = vperm.xlu0 %263, %v122
    %v265 = vpop.permute.xlu0 %264
    %268 = vset.pattern.permute.xlu0 0
    %269 = vperm.xlu0 %268, %v123
    %v270 = vpop.permute.xlu0 %269
    %273 = vset.pattern.permute.xlu0 0
    %274 = vperm.xlu0 %273, %v124
    %v275 = vpop.permute.xlu0 %274
    %278 = vset.pattern.permute.xlu0 0
    %279 = vperm.xlu0 %278, %v125
    %v280 = vpop.permute.xlu0 %279
    %283 = vset.pattern.permute.xlu0 0
    %284 = vperm.xlu0 %283, %v126
    %v285 = vpop.permute.xlu0 %284
    %v287 = vmul.f32 %v31, %v130
    %v288 = vmul.f32 %v32, %v130
    %v289 = vmul.f32 %v33, %v135
    %v290 = vmul.f32 %v34, %v135
    %v291 = vmul.f32 %v35, %v140
    %v292 = vmul.f32 %v36, %v140
    %v293 = vmul.f32 %v37, %v145
    %v294 = vmul.f32 %v38, %v145
    %v295 = vmul.f32 %v39, %v150
    %v296 = vmul.f32 %v40, %v150
    %v297 = vmul.f32 %v41, %v155
    %v298 = vmul.f32 %v42, %v155
    %v299 = vmul.f32 %v43, %v160
    %v300 = vmul.f32 %v44, %v160
    %v301 = vmul.f32 %v45, %v165
    %v302 = vmul.f32 %v46, %v165
    %v303 = vmul.f32 %v47, %v170
    %v304 = vmul.f32 %v48, %v170
    %v305 = vmul.f32 %v49, %v175
    %v306 = vmul.f32 %v50, %v175
    %v307 = vmul.f32 %v51, %v180
    %v308 = vmul.f32 %v52, %v180
    %v309 = vmul.f32 %v53, %v185
    %v310 = vmul.f32 %v54, %v185
    %v311 = vmul.f32 %v55, %v190
    %v312 = vmul.f32 %v56, %v190
    %v313 = vmul.f32 %v57, %v195
    %v314 = vmul.f32 %v58, %v195
    %v315 = vmul.f32 %v59, %v200
    %v316 = vmul.f32 %v60, %v200
    %v317 = vmul.f32 %v61, %v205
    %v318 = vmul.f32 %v62, %v205
    %v319 = vmul.f32 %v63, %v210
    %v320 = vmul.f32 %v64, %v210
    %v321 = vmul.f32 %v65, %v215
    %v322 = vmul.f32 %v66, %v215
    %v323 = vmul.f32 %v67, %v220
    %v324 = vmul.f32 %v68, %v220
    %v325 = vmul.f32 %v69, %v225
    %v326 = vmul.f32 %v70, %v225
    %v327 = vmul.f32 %v71, %v230
    %v328 = vmul.f32 %v72, %v230
    %v329 = vmul.f32 %v73, %v235
    %v330 = vmul.f32 %v74, %v235
    %v331 = vmul.f32 %v75, %v240
    %v332 = vmul.f32 %v76, %v240
    %v333 = vmul.f32 %v77, %v245
    %v334 = vmul.f32 %v78, %v245
    %v335 = vmul.f32 %v79, %v250
    %v336 = vmul.f32 %v80, %v250
    %v337 = vmul.f32 %v81, %v255
    %v338 = vmul.f32 %v82, %v255
    %v339 = vmul.f32 %v83, %v260
    %v340 = vmul.f32 %v84, %v260
    %v341 = vmul.f32 %v85, %v265
    %v342 = vmul.f32 %v86, %v265
    %v343 = vmul.f32 %v87, %v270
    %v344 = vmul.f32 %v88, %v270
    %v345 = vmul.f32 %v89, %v275
    %v346 = vmul.f32 %v90, %v275
    %v347 = vmul.f32 %v91, %v280
    %v348 = vmul.f32 %v92, %v280
    %v349 = vmul.f32 %v93, %v285
    %v350 = vmul.f32 %v94, %v285
    %v351 = vld [vmem:[%s2] sm:$0x3]
    %v353 = vperm.slane %v351, 0
    %v354 = vperm.slane %v351, 1
    %v357 = vmul.f32 %v287, %v353
    %v358 = vmul.f32 %v288, %v354
    %v359 = vmul.f32 %v289, %v353
    %v360 = vmul.f32 %v290, %v354
    %v361 = vmul.f32 %v291, %v353
    %v362 = vmul.f32 %v292, %v354
    %v363 = vmul.f32 %v293, %v353
    %v364 = vmul.f32 %v294, %v354
    %v365 = vmul.f32 %v295, %v353
    %v366 = vmul.f32 %v296, %v354
    %v367 = vmul.f32 %v297, %v353
    %v368 = vmul.f32 %v298, %v354
    %v369 = vmul.f32 %v299, %v353
    %v370 = vmul.f32 %v300, %v354
    %v371 = vmul.f32 %v301, %v353
    %v372 = vmul.f32 %v302, %v354
    %v373 = vmul.f32 %v303, %v353
    %v374 = vmul.f32 %v304, %v354
    %v375 = vmul.f32 %v305, %v353
    %v376 = vmul.f32 %v306, %v354
    %v377 = vmul.f32 %v307, %v353
    %v378 = vmul.f32 %v308, %v354
    %v379 = vmul.f32 %v309, %v353
    %v380 = vmul.f32 %v310, %v354
    %v381 = vmul.f32 %v311, %v353
    %v382 = vmul.f32 %v312, %v354
    %v383 = vmul.f32 %v313, %v353
    %v384 = vmul.f32 %v314, %v354
    %v385 = vmul.f32 %v315, %v353
    %v386 = vmul.f32 %v316, %v354
    %v387 = vmul.f32 %v317, %v353
    %v388 = vmul.f32 %v318, %v354
    %v389 = vmul.f32 %v319, %v353
    %v390 = vmul.f32 %v320, %v354
    %v391 = vmul.f32 %v321, %v353
    %v392 = vmul.f32 %v322, %v354
    %v393 = vmul.f32 %v323, %v353
    %v394 = vmul.f32 %v324, %v354
    %v395 = vmul.f32 %v325, %v353
    %v396 = vmul.f32 %v326, %v354
    %v397 = vmul.f32 %v327, %v353
    %v398 = vmul.f32 %v328, %v354
    %v399 = vmul.f32 %v329, %v353
    %v400 = vmul.f32 %v330, %v354
    %v401 = vmul.f32 %v331, %v353
    %v402 = vmul.f32 %v332, %v354
    %v403 = vmul.f32 %v333, %v353
    %v404 = vmul.f32 %v334, %v354
    %v405 = vmul.f32 %v335, %v353
    %v406 = vmul.f32 %v336, %v354
    %v407 = vmul.f32 %v337, %v353
    %v408 = vmul.f32 %v338, %v354
    %v409 = vmul.f32 %v339, %v353
    %v410 = vmul.f32 %v340, %v354
    %v411 = vmul.f32 %v341, %v353
    %v412 = vmul.f32 %v342, %v354
    %v413 = vmul.f32 %v343, %v353
    %v414 = vmul.f32 %v344, %v354
    %v415 = vmul.f32 %v345, %v353
    %v416 = vmul.f32 %v346, %v354
    %v417 = vmul.f32 %v347, %v353
    %v418 = vmul.f32 %v348, %v354
    %v419 = vmul.f32 %v349, %v353
    %v420 = vmul.f32 %v350, %v354
    %v421 = vpack.c.bf16 %v358, %v357
    %v422 = vpack.c.bf16 %v360, %v359
    %v423 = vpack.c.bf16 %v362, %v361
    %v424 = vpack.c.bf16 %v364, %v363
    %v425 = vpack.c.bf16 %v366, %v365
    %v426 = vpack.c.bf16 %v368, %v367
    %v427 = vpack.c.bf16 %v370, %v369
    %v428 = vpack.c.bf16 %v372, %v371
    %v429 = vpack.c.bf16 %v374, %v373
    %v430 = vpack.c.bf16 %v376, %v375
    %v431 = vpack.c.bf16 %v378, %v377
    %v432 = vpack.c.bf16 %v380, %v379
    %v433 = vpack.c.bf16 %v382, %v381
    %v434 = vpack.c.bf16 %v384, %v383
    %v435 = vpack.c.bf16 %v386, %v385
    %v436 = vpack.c.bf16 %v388, %v387
    %v437 = vpack.c.bf16 %v390, %v389
    %v438 = vpack.c.bf16 %v392, %v391
    %v439 = vpack.c.bf16 %v394, %v393
    %v440 = vpack.c.bf16 %v396, %v395
    %v441 = vpack.c.bf16 %v398, %v397
    %v442 = vpack.c.bf16 %v400, %v399
    %v443 = vpack.c.bf16 %v402, %v401
    %v444 = vpack.c.bf16 %v404, %v403
    %v445 = vpack.c.bf16 %v406, %v405
    %v446 = vpack.c.bf16 %v408, %v407
    %v447 = vpack.c.bf16 %v410, %v409
    %v448 = vpack.c.bf16 %v412, %v411
    %v449 = vpack.c.bf16 %v414, %v413
    %v450 = vpack.c.bf16 %v416, %v415
    %v451 = vpack.c.bf16 %v418, %v417
    %v452 = vpack.c.bf16 %v420, %v419
    %453 = vst [vmem:[#allocation5] sm:$0xff] %v421
    %454 = vst [vmem:[#allocation5 + $0x8] sm:$0xff] %v422
    %455 = vst [vmem:[#allocation5 + $0x10] sm:$0xff] %v423
    %456 = vst [vmem:[#allocation5 + $0x18] sm:$0xff] %v424
    %457 = vst [vmem:[#allocation5 + $0x20] sm:$0xff] %v425
    %458 = vst [vmem:[#allocation5 + $0x28] sm:$0xff] %v426
    %459 = vst [vmem:[#allocation5 + $0x30] sm:$0xff] %v427
    %460 = vst [vmem:[#allocation5 + $0x38] sm:$0xff] %v428
    %461 = vst [vmem:[#allocation5 + $0x40] sm:$0xff] %v429
    %462 = vst [vmem:[#allocation5 + $0x48] sm:$0xff] %v430
    %463 = vst [vmem:[#allocation5 + $0x50] sm:$0xff] %v431
    %464 = vst [vmem:[#allocation5 + $0x58] sm:$0xff] %v432
    %465 = vst [vmem:[#allocation5 + $0x60] sm:$0xff] %v433
    %466 = vst [vmem:[#allocation5 + $0x68] sm:$0xff] %v434
    %467 = vst [vmem:[#allocation5 + $0x70] sm:$0xff] %v435
    %468 = vst [vmem:[#allocation5 + $0x78] sm:$0xff] %v436
    %469 = vst [vmem:[#allocation5 + $0x80] sm:$0xff] %v437
    %470 = vst [vmem:[#allocation5 + $0x88] sm:$0xff] %v438
    %471 = vst [vmem:[#allocation5 + $0x90] sm:$0xff] %v439
    %472 = vst [vmem:[#allocation5 + $0x98] sm:$0xff] %v440
    %473 = vst [vmem:[#allocation5 + $0xa0] sm:$0xff] %v441
    %474 = vst [vmem:[#allocation5 + $0xa8] sm:$0xff] %v442
    %475 = vst [vmem:[#allocation5 + $0xb0] sm:$0xff] %v443
    %476 = vst [vmem:[#allocation5 + $0xb8] sm:$0xff] %v444
    %477 = vst [vmem:[#allocation5 + $0xc0] sm:$0xff] %v445
    %478 = vst [vmem:[#allocation5 + $0xc8] sm:$0xff] %v446
    %479 = vst [vmem:[#allocation5 + $0xd0] sm:$0xff] %v447
    %480 = vst [vmem:[#allocation5 + $0xd8] sm:$0xff] %v448
    %481 = vst [vmem:[#allocation5 + $0xe0] sm:$0xff] %v449
    %482 = vst [vmem:[#allocation5 + $0xe8] sm:$0xff] %v450
    %483 = vst [vmem:[#allocation5 + $0xf0] sm:$0xff] %v451
    %484 = vst [vmem:[#allocation5 + $0xf8] sm:$0xff] %v452
    // Predicated region
    $region18: #{tpu_custom_call.1} parent=1 // pred_check
      _
    $region19: #{tpu_custom_call.1} parent=1 // pred_check_branch
      %486 = sbr.rel (0) target = $region21
    $region20: #{tpu_custom_call.1} parent=1 // pred_region
      %488 = vsyncadd [#allocation4], 0
      %s489 = sshll.u32 [#allocation5], 4
      %s490 = int_to_ptr.vmem [resolvable:$true] %s489
      %s491 = sshll.u32 %s3, 4
      %s492 = int_to_ptr.hbm [resolvable:$true] %s491
      %497 = dma.vmem_to_hbm [thread:$0]  %s490, 4096, %s492, [#allocation4], 128, 128, 8
    $region21: #{tpu_custom_call.1} parent=1 // pred_fallthru
      _
    // Predicated region
    $region22: #{tpu_custom_call.1} parent=1 // pred_check
      _
    $region23: #{tpu_custom_call.1} parent=1 // pred_check_branch
      %499 = sbr.rel (0) target = $region25
    $region24: #{tpu_custom_call.1} parent=1 // pred_region
      %501 = dma.done [#allocation4], 4096
    $region25: #{tpu_custom_call.1} parent=1 // pred_fallthru
      _
    %502 = vsyncpa [#allocation3], 1
    %503 = vsyncpa [#allocation4], 1

</llo_original>
